<compile_context>
chip_gen: v5e
topology: v5e:2x2
jax: 0.10.0
libtpu: 0.0.40
codegen_flags: <defaults>
</compile_context>

<pallas_src>
import functools

import jax
import jax.numpy as jnp
from jax.experimental import pallas as pl
from jax.experimental.pallas import tpu as pltpu

LN_EPS = 1e-5


def _round_up(n, m):
    return ((n + m - 1) // m) * m


def _layernorm(h, gamma, beta):
    # E[x^2] - E[x]^2 form: the two reductions over the feature axis are
    # independent (overlap on the XLU).  Biased variance matches PyTorch.
    mu = jnp.mean(h, axis=-1, keepdims=True)
    ms = jnp.mean(h * h, axis=-1, keepdims=True)
    var = jnp.maximum(ms - mu * mu, 0.0)
    return (h - mu) * jax.lax.rsqrt(var + LN_EPS) * gamma + beta


def _relu(h):
    return jnp.maximum(h, 0.0)


# --------------------------------------------------------------------------
# Kernel 1: whole-batch cdt path -> final cdt + per-layer (shift, scale).
# --------------------------------------------------------------------------
def cdt_kernel(n_res_layers,
               cdt_ref,
               wc1_ref, bc1_ref, gc1_ref, bec1_ref,
               wc2_ref, bc2_ref, gc2_ref, bec2_ref,
               wcr_ref, bcr_ref, gcr_ref, becr_ref,
               wsh_ref, bsh_ref, wsc_ref, bsc_ref,
               cdt_out_ref, shift_ref, scale_ref):
    c = cdt_ref[...]                                   # (B, C)
    B, C = c.shape

    # cdt = self.cdt_in(cdt): Linear -> LN -> ReLU -> Linear -> LN -> ReLU
    c = _relu(_layernorm(
        jnp.dot(c, wc1_ref[...], preferred_element_type=jnp.float32) + bc1_ref[...],
        gc1_ref[...], bec1_ref[...]))
    c = _relu(_layernorm(
        jnp.dot(c, wc2_ref[...], preferred_element_type=jnp.float32) + bc2_ref[...],
        gc2_ref[...], bec2_ref[...]))

    # Hoist loop-invariant loads / broadcasts out of the unrolled loop.
    wcr = wcr_ref[...]
    bcr = jnp.broadcast_to(bcr_ref[...], (B, C))
    gcr = jnp.broadcast_to(gcr_ref[...], (B, C))
    becr = jnp.broadcast_to(becr_ref[...], (B, C))
    wsh, bsh = wsh_ref[...], bsh_ref[...]
    wsc, bsc = wsc_ref[...], bsc_ref[...]

    # Parameters are shared across layers (ModuleList([block] * n) semantics).
    for l in range(n_res_layers):
        c = c + _relu(_layernorm(
            jnp.dot(c, wcr, preferred_element_type=jnp.float32) + bcr, gcr, becr))
        shift_ref[l] = jnp.dot(c, wsh, preferred_element_type=jnp.float32) + bsh
        scale_ref[l] = jnp.dot(c, wsc, preferred_element_type=jnp.float32) + bsc

    cdt_out_ref[...] = c


# --------------------------------------------------------------------------
# Kernel 2: x path over flattened (B*L) rows, tiled along M.
# --------------------------------------------------------------------------
def x_kernel(n_res_layers, mm_dtype,
             x_ref, q_ref, shift_ref, scale_ref,
             win_ref, bin_ref,
             wr_ref, br_ref, gr_ref, ber_ref,
             wout_ref, bout_ref,
             out_ref):
    x = x_ref[...].astype(mm_dtype)                    # (TM, in_dim)
    q = q_ref[...]                                     # (TM, D)

    # x = self.weight_in(x)
    h = jnp.dot(x, win_ref[...].astype(mm_dtype),
                preferred_element_type=jnp.float32) + bin_ref[...]
    TM, D = h.shape

    # Hoist loop-invariant weight load and (1, D) -> (TM, D) broadcasts.
    wr = wr_ref[...].astype(mm_dtype)
    br = jnp.broadcast_to(br_ref[...], (TM, D))
    gr = jnp.broadcast_to(gr_ref[...], (TM, D))
    ber = jnp.broadcast_to(ber_ref[...], (TM, D))

    for l in range(n_res_layers):
        # x = Linear_ResBlock(x): x + ReLU(LN(Linear(x)))   (shared params)
        r = _relu(_layernorm(
            jnp.dot(h.astype(mm_dtype), wr, preferred_element_type=jnp.float32) + br,
            gr, ber))
        h = h + r
        # x = scale * x + shift ; x = x * q_embedding
        h = scale_ref[l] * h + shift_ref[l]
        h = h * q

    out_ref[...] = (jnp.dot(h.astype(mm_dtype), wout_ref[...].astype(mm_dtype),
                            preferred_element_type=jnp.float32) + bout_ref[...])


# --------------------------------------------------------------------------
# Wrapper
# --------------------------------------------------------------------------
def encoder_forward(params, x, q_embedding, cdt, n_res_layers, *,
                    use_bf16_matmul=False):
    assert n_res_layers >= 1
    B, L, in_dim = x.shape
    D = params["w_in"].shape[1]
    Dout = params["w_out"].shape[1]
    C = cdt.shape[1]
    mm_dtype = jnp.bfloat16 if use_bf16_matmul else jnp.float32

    def full_spec(arr):
        nd = arr.ndim
        return pl.BlockSpec(arr.shape, lambda i, _nd=nd: (0,) * _nd)

    # ---- Phase 1: cdt path over the whole batch (one tiny kernel call) ----
    # Split cdt_stack_2's Linear(C, 2*D) into lane-aligned shift/scale weights
    # (chunk order: shift = first D columns, scale = last D columns).
    w_sc, b_sc = params["w_sc"], params["b_sc"]
    w_shift, w_scale = w_sc[:, :D], w_sc[:, D:]
    b_shift, b_scale = b_sc[:, :D], b_sc[:, D:]

    cdt_weights = [
        params["w_c1"], params["b_c1"], params["g_c1"], params["be_c1"],
        params["w_c2"], params["b_c2"], params["g_c2"], params["be_c2"],
        params["w_cr"], params["b_cr"], params["g_cr"], params["be_cr"],
        w_shift, b_shift, w_scale, b_scale,
    ]

    cdt_out, shift_b, scale_b = pl.pallas_call(
        functools.partial(cdt_kernel, n_res_layers),
        out_shape=(jax.ShapeDtypeStruct((B, C), jnp.float32),
                   jax.ShapeDtypeStruct((n_res_layers, B, D), jnp.float32),
                   jax.ShapeDtypeStruct((n_res_layers, B, D), jnp.float32)),
        grid_spec=pltpu.PrefetchScalarGridSpec(
            num_scalar_prefetch=0,
            grid=(1,),
            in_specs=[full_spec(cdt)] + [full_spec(w) for w in cdt_weights],
            out_specs=(full_spec(cdt),
                       pl.BlockSpec((n_res_layers, B, D), lambda i: (0, 0, 0)),
                       pl.BlockSpec((n_res_layers, B, D), lambda i: (0, 0, 0))),
        ),
        compiler_params=pltpu.CompilerParams(dimension_semantics=("arbitrary",)),
    )(cdt, *cdt_weights)

    # ---- Phase 2: x path — flatten (B, L) into M rows and tile over M ----
    M = B * L
    if M >= 512:
        TM = 512
    elif M >= 256:
        TM = 256
    else:
        TM = _round_up(M, 8)
    Mpad = _round_up(M, TM)
    Dout_pad = _round_up(Dout, 128)      # lane-dense output stores

    x2 = x.reshape(M, in_dim)
    q2 = q_embedding.reshape(M, D)
    # Expand per-batch (shift, scale) to per-row so M-tiles may span batches.
    shift_rows = jnp.broadcast_to(
        shift_b[:, :, None, :], (n_res_layers, B, L, D)).reshape(n_res_layers, M, D)
    scale_rows = jnp.broadcast_to(
        scale_b[:, :, None, :], (n_res_layers, B, L, D)).reshape(n_res_layers, M, D)

    pad_m = Mpad - M
    if pad_m:
        x2 = jnp.pad(x2, ((0, pad_m), (0, 0)))
        q2 = jnp.pad(q2, ((0, pad_m), (0, 0)))
        shift_rows = jnp.pad(shift_rows, ((0, 0), (0, pad_m), (0, 0)))
        scale_rows = jnp.pad(scale_rows, ((0, 0), (0, pad_m), (0, 0)))

    # Zero-pad the output projection so out last-dim is a multiple of 128.
    w_out_p = jnp.pad(params["w_out"], ((0, 0), (0, Dout_pad - Dout)))
    b_out_p = jnp.pad(params["b_out"], ((0, 0), (0, Dout_pad - Dout)))

    x_weights = [params["w_in"], params["b_in"],
                 params["w_r"], params["b_r"], params["g_r"], params["be_r"],
                 w_out_p, b_out_p]

    n_tiles = Mpad // TM
    weight_bytes = sum(int(w.size) * 4 for w in x_weights)
    tile_bytes = 4 * (TM * in_dim + TM * D
                      + 2 * n_res_layers * TM * D + TM * Dout_pad)
    vmem_limit = int(min(max(2 * (weight_bytes + tile_bytes) + (4 << 20), 8 << 20),
                         48 << 20))

    in_specs = [
        pl.BlockSpec((TM, in_dim), lambda i: (i, 0)),
        pl.BlockSpec((TM, D), lambda i: (i, 0)),
        pl.BlockSpec((n_res_layers, TM, D), lambda i: (0, i, 0)),
        pl.BlockSpec((n_res_layers, TM, D), lambda i: (0, i, 0)),
    ] + [full_spec(w) for w in x_weights]

    out_p = pl.pallas_call(
        functools.partial(x_kernel, n_res_layers, mm_dtype),
        out_shape=jax.ShapeDtypeStruct((Mpad, Dout_pad), jnp.float32),
        grid_spec=pltpu.PrefetchScalarGridSpec(
            num_scalar_prefetch=0,
            grid=(n_tiles,),
            in_specs=in_specs,
            out_specs=pl.BlockSpec((TM, Dout_pad), lambda i: (i, 0)),
        ),
        compiler_params=pltpu.CompilerParams(
            dimension_semantics=("parallel",),
            vmem_limit_bytes=vmem_limit),
    )(x2, q2, shift_rows, scale_rows, *x_weights)

    out = out_p[:M, :Dout].reshape(B, L, Dout)
    return out, cdt_out


# --------------------------------------------------------------------------
# Pure-JAX reference of the PyTorch forward, for verification.
# --------------------------------------------------------------------------
def encoder_ref(params, x, q, cdt, n_res_layers):
    def ln(h, g, b):
        mu = h.mean(-1, keepdims=True)
        var = ((h - mu) ** 2).mean(-1, keepdims=True)
        return (h - mu) / jnp.sqrt(var + LN_EPS) * g + b

    D = params["w_in"].shape[1]
    h = x @ params["w_in"] + params["b_in"]
    c = jnp.maximum(ln(cdt @ params["w_c1"] + params["b_c1"],
                       params["g_c1"], params["be_c1"]), 0.0)
    c = jnp.maximum(ln(c @ params["w_c2"] + params["b_c2"],
                       params["g_c2"], params["be_c2"]), 0.0)
    for _ in range(n_res_layers):
        h = h + jnp.maximum(ln(h @ params["w_r"] + params["b_r"],
                               params["g_r"], params["be_r"]), 0.0)
        c = c + jnp.maximum(ln(c @ params["w_cr"] + params["b_cr"],
                               params["g_cr"], params["be_cr"]), 0.0)
        sc = c @ params["w_sc"] + params["b_sc"]
        shift = sc[:, None, :D]
        scale = sc[:, None, D:]
        h = scale * h + shift
        h = h * q
    return h @ params["w_out"] + params["b_out"], c


def make_params(key, in_dim, dim_encoder, dim_encoder_out, C):
    ks = jax.random.split(key, 8)
    s = 0.1
    return {
        # weight_in
        "w_in": jax.random.normal(ks[0], (in_dim, dim_encoder), jnp.float32) * s,
        "b_in": jnp.zeros((1, dim_encoder), jnp.float32),
        # shared x residual block
        "w_r": jax.random.normal(ks[1], (dim_encoder, dim_encoder), jnp.float32) * s,
        "b_r": jnp.zeros((1, dim_encoder), jnp.float32),
        "g_r": jnp.ones((1, dim_encoder), jnp.float32),
        "be_r": jnp.zeros((1, dim_encoder), jnp.float32),
        # weight_out
        "w_out": jax.random.normal(ks[2], (dim_encoder, dim_encoder_out), jnp.float32) * s,
        "b_out": jnp.zeros((1, dim_encoder_out), jnp.float32),
        # cdt_in
        "w_c1": jax.random.normal(ks[3], (C, C), jnp.float32) * s,
        "b_c1": jnp.zeros((1, C), jnp.float32),
        "g_c1": jnp.ones((1, C), jnp.float32),
        "be_c1": jnp.zeros((1, C), jnp.float32),
        "w_c2": jax.random.normal(ks[4], (C, C), jnp.float32) * s,
        "b_c2": jnp.zeros((1, C), jnp.float32),
        "g_c2": jnp.ones((1, C), jnp.float32),
        "be_c2": jnp.zeros((1, C), jnp.float32),
        # shared cdt residual block
        "w_cr": jax.random.normal(ks[5], (C, C), jnp.float32) * s,
        "b_cr": jnp.zeros((1, C), jnp.float32),
        "g_cr": jnp.ones((1, C), jnp.float32),
        "be_cr": jnp.zeros((1, C), jnp.float32),
        # shared cdt_stack_2: Linear(C, 2 * dim_encoder)
        "w_sc": jax.random.normal(ks[6], (C, 2 * dim_encoder), jnp.float32) * s,
        "b_sc": jax.random.normal(ks[7], (1, 2 * dim_encoder), jnp.float32) * s,
    }


if __name__ == "__main__":
    B, L = 2, 8
    in_dim, dim_encoder, dim_encoder_out, C = 16, 32, 16, 16
    n_res_layers = 2

    key = jax.random.PRNGKey(0)
    kp, kx, kq, kc = jax.random.split(key, 4)
    params = make_params(kp, in_dim, dim_encoder, dim_encoder_out, C)

    x = jax.random.normal(kx, (B, L, in_dim), jnp.float32)
    q_embedding = jax.random.normal(kq, (B, L, dim_encoder), jnp.float32)
    cdt = jax.random.normal(kc, (B, C), jnp.float32)

    out, cdt_out = encoder_forward(params, x, q_embedding, cdt, n_res_layers)
    out, cdt_out = jax.block_until_ready((out, cdt_out))

    ref_out, ref_cdt = encoder_ref(params, x, q_embedding, cdt, n_res_layers)
    assert out.shape == (B, L, dim_encoder_out) and cdt_out.shape == (B, C)
    assert jnp.allclose(out, ref_out, atol=1e-4, rtol=1e-4)
    assert jnp.allclose(cdt_out, ref_cdt, atol=1e-4, rtol=1e-4)

    print("KERNEL_OK")
</pallas_src>

<mosaic_0001>
module attributes {stable_mosaic.version = 11 : i64} {
  func.func @cdt_kernel(%arg0: i32, %arg1: memref<2x16xf32, #tpu.memory_space<vmem>>, %arg2: memref<16x16xf32, #tpu.memory_space<vmem>>, %arg3: memref<1x16xf32, #tpu.memory_space<vmem>>, %arg4: memref<1x16xf32, #tpu.memory_space<vmem>>, %arg5: memref<1x16xf32, #tpu.memory_space<vmem>>, %arg6: memref<16x16xf32, #tpu.memory_space<vmem>>, %arg7: memref<1x16xf32, #tpu.memory_space<vmem>>, %arg8: memref<1x16xf32, #tpu.memory_space<vmem>>, %arg9: memref<1x16xf32, #tpu.memory_space<vmem>>, %arg10: memref<16x16xf32, #tpu.memory_space<vmem>>, %arg11: memref<1x16xf32, #tpu.memory_space<vmem>>, %arg12: memref<1x16xf32, #tpu.memory_space<vmem>>, %arg13: memref<1x16xf32, #tpu.memory_space<vmem>>, %arg14: memref<16x32xf32, #tpu.memory_space<vmem>>, %arg15: memref<1x32xf32, #tpu.memory_space<vmem>>, %arg16: memref<16x32xf32, #tpu.memory_space<vmem>>, %arg17: memref<1x32xf32, #tpu.memory_space<vmem>>, %arg18: memref<2x16xf32, #tpu.memory_space<vmem>>, %arg19: memref<2x2x32xf32, #tpu.memory_space<vmem>>, %arg20: memref<2x2x32xf32, #tpu.memory_space<vmem>>) attributes {dimension_semantics = [#tpu.dimension_semantics<arbitrary>], iteration_bounds = array<i64: 1>, scalar_prefetch = 0 : i64, scratch_operands = 0 : i64, tpu.core_type = #tpu.core_type<tc>, window_params = [{pipeline_mode = #tpu.pipeline_mode<synchronous>, transform_indices = @transform_0, window_bounds = array<i64: 2, 16>}, {pipeline_mode = #tpu.pipeline_mode<synchronous>, transform_indices = @transform_1, window_bounds = array<i64: 16, 16>}, {pipeline_mode = #tpu.pipeline_mode<synchronous>, transform_indices = @transform_2, window_bounds = array<i64: 1, 16>}, {pipeline_mode = #tpu.pipeline_mode<synchronous>, transform_indices = @transform_3, window_bounds = array<i64: 1, 16>}, {pipeline_mode = #tpu.pipeline_mode<synchronous>, transform_indices = @transform_4, window_bounds = array<i64: 1, 16>}, {pipeline_mode = #tpu.pipeline_mode<synchronous>, transform_indices = @transform_5, window_bounds = array<i64: 16, 16>}, {pipeline_mode = #tpu.pipeline_mode<synchronous>, transform_indices = @transform_6, window_bounds = array<i64: 1, 16>}, {pipeline_mode = #tpu.pipeline_mode<synchronous>, transform_indices = @transform_7, window_bounds = array<i64: 1, 16>}, {pipeline_mode = #tpu.pipeline_mode<synchronous>, transform_indices = @transform_8, window_bounds = array<i64: 1, 16>}, {pipeline_mode = #tpu.pipeline_mode<synchronous>, transform_indices = @transform_9, window_bounds = array<i64: 16, 16>}, {pipeline_mode = #tpu.pipeline_mode<synchronous>, transform_indices = @transform_10, window_bounds = array<i64: 1, 16>}, {pipeline_mode = #tpu.pipeline_mode<synchronous>, transform_indices = @transform_11, window_bounds = array<i64: 1, 16>}, {pipeline_mode = #tpu.pipeline_mode<synchronous>, transform_indices = @transform_12, window_bounds = array<i64: 1, 16>}, {pipeline_mode = #tpu.pipeline_mode<synchronous>, transform_indices = @transform_13, window_bounds = array<i64: 16, 32>}, {pipeline_mode = #tpu.pipeline_mode<synchronous>, transform_indices = @transform_14, window_bounds = array<i64: 1, 32>}, {pipeline_mode = #tpu.pipeline_mode<synchronous>, transform_indices = @transform_15, window_bounds = array<i64: 16, 32>}, {pipeline_mode = #tpu.pipeline_mode<synchronous>, transform_indices = @transform_16, window_bounds = array<i64: 1, 32>}, {pipeline_mode = #tpu.pipeline_mode<synchronous>, transform_indices = @transform_17, window_bounds = array<i64: 2, 16>}, {pipeline_mode = #tpu.pipeline_mode<synchronous>, transform_indices = @transform_18, window_bounds = array<i64: 2, 2, 32>}, {pipeline_mode = #tpu.pipeline_mode<synchronous>, transform_indices = @transform_19, window_bounds = array<i64: 2, 2, 32>}]} {
    %c0 = arith.constant 0 : index
    %c0_0 = arith.constant 0 : index
    %0 = vector.load %arg1[%c0, %c0_0] : memref<2x16xf32, #tpu.memory_space<vmem>>, vector<2x16xf32>
    %c0_1 = arith.constant 0 : index
    %c0_2 = arith.constant 0 : index
    %1 = vector.load %arg2[%c0_1, %c0_2] : memref<16x16xf32, #tpu.memory_space<vmem>>, vector<16x16xf32>
    %cst = arith.constant dense<0.000000e+00> : vector<2x16xf32>
    %2 = tpu.matmul %0, %1, %cst {dimension_numbers = #tpu.dot_dimension_numbers<[1], [0], [0], [1], [0, 0, 1, 1], [], []>} : vector<2x16xf32>, vector<16x16xf32>, vector<2x16xf32> -> vector<2x16xf32>
    %c0_3 = arith.constant 0 : index
    %c0_4 = arith.constant 0 : index
    %3 = vector.load %arg3[%c0_3, %c0_4] : memref<1x16xf32, #tpu.memory_space<vmem>>, vector<1x16xf32>
    %4 = vector.broadcast %3 : vector<1x16xf32> to vector<2x16xf32>
    %5 = arith.addf %2, %4 : vector<2x16xf32>
    %c0_5 = arith.constant 0 : index
    %c0_6 = arith.constant 0 : index
    %6 = vector.load %arg4[%c0_5, %c0_6] : memref<1x16xf32, #tpu.memory_space<vmem>>, vector<1x16xf32>
    %c0_7 = arith.constant 0 : index
    %c0_8 = arith.constant 0 : index
    %7 = vector.load %arg5[%c0_7, %c0_8] : memref<1x16xf32, #tpu.memory_space<vmem>>, vector<1x16xf32>
    %cst_9 = arith.constant dense<0.000000e+00> : vector<2xf32>
    %8 = vector.multi_reduction <add>, %5, %cst_9 [1] : vector<2x16xf32> to vector<2xf32>
    %9 = vector.shape_cast %8 : vector<2xf32> to vector<2x1xf32>
    %cst_10 = arith.constant 1.600000e+01 : f32
    %10 = vector.broadcast %cst_10 : f32 to vector<2x1xf32>
    %11 = arith.divf %9, %10 : vector<2x1xf32>
    %12 = arith.mulf %5, %5 : vector<2x16xf32>
    %cst_11 = arith.constant dense<0.000000e+00> : vector<2xf32>
    %13 = vector.multi_reduction <add>, %12, %cst_11 [1] : vector<2x16xf32> to vector<2xf32>
    %14 = vector.shape_cast %13 : vector<2xf32> to vector<2x1xf32>
    %cst_12 = arith.constant 1.600000e+01 : f32
    %15 = vector.broadcast %cst_12 : f32 to vector<2x1xf32>
    %16 = arith.divf %14, %15 : vector<2x1xf32>
    %17 = arith.mulf %11, %11 : vector<2x1xf32>
    %18 = arith.subf %16, %17 : vector<2x1xf32>
    %cst_13 = arith.constant 0.000000e+00 : f32
    %19 = vector.broadcast %cst_13 : f32 to vector<2x1xf32>
    %20 = arith.maximumf %18, %19 : vector<2x1xf32>
    %21 = vector.broadcast %11 : vector<2x1xf32> to vector<2x16xf32>
    %22 = arith.subf %5, %21 : vector<2x16xf32>
    %cst_14 = arith.constant 9.99999974E-6 : f32
    %23 = vector.broadcast %cst_14 : f32 to vector<2x1xf32>
    %24 = arith.addf %20, %23 : vector<2x1xf32>
    %25 = math.rsqrt %24 : vector<2x1xf32>
    %26 = vector.broadcast %25 : vector<2x1xf32> to vector<2x16xf32>
    %27 = arith.mulf %22, %26 : vector<2x16xf32>
    %28 = vector.broadcast %6 : vector<1x16xf32> to vector<2x16xf32>
    %29 = arith.mulf %27, %28 : vector<2x16xf32>
    %30 = vector.broadcast %7 : vector<1x16xf32> to vector<2x16xf32>
    %31 = arith.addf %29, %30 : vector<2x16xf32>
    %cst_15 = arith.constant 0.000000e+00 : f32
    %32 = vector.broadcast %cst_15 : f32 to vector<2x16xf32>
    %33 = arith.maximumf %31, %32 : vector<2x16xf32>
    %c0_16 = arith.constant 0 : index
    %c0_17 = arith.constant 0 : index
    %34 = vector.load %arg6[%c0_16, %c0_17] : memref<16x16xf32, #tpu.memory_space<vmem>>, vector<16x16xf32>
    %cst_18 = arith.constant dense<0.000000e+00> : vector<2x16xf32>
    %35 = tpu.matmul %33, %34, %cst_18 {dimension_numbers = #tpu.dot_dimension_numbers<[1], [0], [0], [1], [0, 0, 1, 1], [], []>} : vector<2x16xf32>, vector<16x16xf32>, vector<2x16xf32> -> vector<2x16xf32>
    %c0_19 = arith.constant 0 : index
    %c0_20 = arith.constant 0 : index
    %36 = vector.load %arg7[%c0_19, %c0_20] : memref<1x16xf32, #tpu.memory_space<vmem>>, vector<1x16xf32>
    %37 = vector.broadcast %36 : vector<1x16xf32> to vector<2x16xf32>
    %38 = arith.addf %35, %37 : vector<2x16xf32>
    %c0_21 = arith.constant 0 : index
    %c0_22 = arith.constant 0 : index
    %39 = vector.load %arg8[%c0_21, %c0_22] : memref<1x16xf32, #tpu.memory_space<vmem>>, vector<1x16xf32>
    %c0_23 = arith.constant 0 : index
    %c0_24 = arith.constant 0 : index
    %40 = vector.load %arg9[%c0_23, %c0_24] : memref<1x16xf32, #tpu.memory_space<vmem>>, vector<1x16xf32>
    %cst_25 = arith.constant dense<0.000000e+00> : vector<2xf32>
    %41 = vector.multi_reduction <add>, %38, %cst_25 [1] : vector<2x16xf32> to vector<2xf32>
    %42 = vector.shape_cast %41 : vector<2xf32> to vector<2x1xf32>
    %cst_26 = arith.constant 1.600000e+01 : f32
    %43 = vector.broadcast %cst_26 : f32 to vector<2x1xf32>
    %44 = arith.divf %42, %43 : vector<2x1xf32>
    %45 = arith.mulf %38, %38 : vector<2x16xf32>
    %cst_27 = arith.constant dense<0.000000e+00> : vector<2xf32>
    %46 = vector.multi_reduction <add>, %45, %cst_27 [1] : vector<2x16xf32> to vector<2xf32>
    %47 = vector.shape_cast %46 : vector<2xf32> to vector<2x1xf32>
    %cst_28 = arith.constant 1.600000e+01 : f32
    %48 = vector.broadcast %cst_28 : f32 to vector<2x1xf32>
    %49 = arith.divf %47, %48 : vector<2x1xf32>
    %50 = arith.mulf %44, %44 : vector<2x1xf32>
    %51 = arith.subf %49, %50 : vector<2x1xf32>
    %cst_29 = arith.constant 0.000000e+00 : f32
    %52 = vector.broadcast %cst_29 : f32 to vector<2x1xf32>
    %53 = arith.maximumf %51, %52 : vector<2x1xf32>
    %54 = vector.broadcast %44 : vector<2x1xf32> to vector<2x16xf32>
    %55 = arith.subf %38, %54 : vector<2x16xf32>
    %cst_30 = arith.constant 9.99999974E-6 : f32
    %56 = vector.broadcast %cst_30 : f32 to vector<2x1xf32>
    %57 = arith.addf %53, %56 : vector<2x1xf32>
    %58 = math.rsqrt %57 : vector<2x1xf32>
    %59 = vector.broadcast %58 : vector<2x1xf32> to vector<2x16xf32>
    %60 = arith.mulf %55, %59 : vector<2x16xf32>
    %61 = vector.broadcast %39 : vector<1x16xf32> to vector<2x16xf32>
    %62 = arith.mulf %60, %61 : vector<2x16xf32>
    %63 = vector.broadcast %40 : vector<1x16xf32> to vector<2x16xf32>
    %64 = arith.addf %62, %63 : vector<2x16xf32>
    %cst_31 = arith.constant 0.000000e+00 : f32
    %65 = vector.broadcast %cst_31 : f32 to vector<2x16xf32>
    %66 = arith.maximumf %64, %65 : vector<2x16xf32>
    %c0_32 = arith.constant 0 : index
    %c0_33 = arith.constant 0 : index
    %67 = vector.load %arg10[%c0_32, %c0_33] : memref<16x16xf32, #tpu.memory_space<vmem>>, vector<16x16xf32>
    %c0_34 = arith.constant 0 : index
    %c0_35 = arith.constant 0 : index
    %68 = vector.load %arg11[%c0_34, %c0_35] : memref<1x16xf32, #tpu.memory_space<vmem>>, vector<1x16xf32>
    %69 = vector.shape_cast %68 : vector<1x16xf32> to vector<1x16xf32>
    %70 = vector.broadcast %69 : vector<1x16xf32> to vector<2x16xf32>
    %c0_36 = arith.constant 0 : index
    %c0_37 = arith.constant 0 : index
    %71 = vector.load %arg12[%c0_36, %c0_37] : memref<1x16xf32, #tpu.memory_space<vmem>>, vector<1x16xf32>
    %72 = vector.shape_cast %71 : vector<1x16xf32> to vector<1x16xf32>
    %73 = vector.broadcast %72 : vector<1x16xf32> to vector<2x16xf32>
    %c0_38 = arith.constant 0 : index
    %c0_39 = arith.constant 0 : index
    %74 = vector.load %arg13[%c0_38, %c0_39] : memref<1x16xf32, #tpu.memory_space<vmem>>, vector<1x16xf32>
    %75 = vector.shape_cast %74 : vector<1x16xf32> to vector<1x16xf32>
    %76 = vector.broadcast %75 : vector<1x16xf32> to vector<2x16xf32>
    %c0_40 = arith.constant 0 : index
    %c0_41 = arith.constant 0 : index
    %77 = vector.load %arg14[%c0_40, %c0_41] : memref<16x32xf32, #tpu.memory_space<vmem>>, vector<16x32xf32>
    %c0_42 = arith.constant 0 : index
    %c0_43 = arith.constant 0 : index
    %78 = vector.load %arg15[%c0_42, %c0_43] : memref<1x32xf32, #tpu.memory_space<vmem>>, vector<1x32xf32>
    %c0_44 = arith.constant 0 : index
    %c0_45 = arith.constant 0 : index
    %79 = vector.load %arg16[%c0_44, %c0_45] : memref<16x32xf32, #tpu.memory_space<vmem>>, vector<16x32xf32>
    %c0_46 = arith.constant 0 : index
    %c0_47 = arith.constant 0 : index
    %80 = vector.load %arg17[%c0_46, %c0_47] : memref<1x32xf32, #tpu.memory_space<vmem>>, vector<1x32xf32>
    %cst_48 = arith.constant dense<0.000000e+00> : vector<2x16xf32>
    %81 = tpu.matmul %66, %67, %cst_48 {dimension_numbers = #tpu.dot_dimension_numbers<[1], [0], [0], [1], [0, 0, 1, 1], [], []>} : vector<2x16xf32>, vector<16x16xf32>, vector<2x16xf32> -> vector<2x16xf32>
    %82 = arith.addf %81, %70 : vector<2x16xf32>
    %cst_49 = arith.constant dense<0.000000e+00> : vector<2xf32>
    %83 = vector.multi_reduction <add>, %82, %cst_49 [1] : vector<2x16xf32> to vector<2xf32>
    %84 = vector.shape_cast %83 : vector<2xf32> to vector<2x1xf32>
    %cst_50 = arith.constant 1.600000e+01 : f32
    %85 = vector.broadcast %cst_50 : f32 to vector<2x1xf32>
    %86 = arith.divf %84, %85 : vector<2x1xf32>
    %87 = arith.mulf %82, %82 : vector<2x16xf32>
    %cst_51 = arith.constant dense<0.000000e+00> : vector<2xf32>
    %88 = vector.multi_reduction <add>, %87, %cst_51 [1] : vector<2x16xf32> to vector<2xf32>
    %89 = vector.shape_cast %88 : vector<2xf32> to vector<2x1xf32>
    %cst_52 = arith.constant 1.600000e+01 : f32
    %90 = vector.broadcast %cst_52 : f32 to vector<2x1xf32>
    %91 = arith.divf %89, %90 : vector<2x1xf32>
    %92 = arith.mulf %86, %86 : vector<2x1xf32>
    %93 = arith.subf %91, %92 : vector<2x1xf32>
    %cst_53 = arith.constant 0.000000e+00 : f32
    %94 = vector.broadcast %cst_53 : f32 to vector<2x1xf32>
    %95 = arith.maximumf %93, %94 : vector<2x1xf32>
    %96 = vector.broadcast %86 : vector<2x1xf32> to vector<2x16xf32>
    %97 = arith.subf %82, %96 : vector<2x16xf32>
    %cst_54 = arith.constant 9.99999974E-6 : f32
    %98 = vector.broadcast %cst_54 : f32 to vector<2x1xf32>
    %99 = arith.addf %95, %98 : vector<2x1xf32>
    %100 = math.rsqrt %99 : vector<2x1xf32>
    %101 = vector.broadcast %100 : vector<2x1xf32> to vector<2x16xf32>
    %102 = arith.mulf %97, %101 : vector<2x16xf32>
    %103 = arith.mulf %102, %73 : vector<2x16xf32>
    %104 = arith.addf %103, %76 : vector<2x16xf32>
    %cst_55 = arith.constant 0.000000e+00 : f32
    %105 = vector.broadcast %cst_55 : f32 to vector<2x16xf32>
    %106 = arith.maximumf %104, %105 : vector<2x16xf32>
    %107 = arith.addf %66, %106 : vector<2x16xf32>
    %cst_56 = arith.constant dense<0.000000e+00> : vector<2x32xf32>
    %108 = tpu.matmul %107, %77, %cst_56 {dimension_numbers = #tpu.dot_dimension_numbers<[1], [0], [0], [1], [0, 0, 1, 1], [], []>} : vector<2x16xf32>, vector<16x32xf32>, vector<2x32xf32> -> vector<2x32xf32>
    %109 = vector.broadcast %78 : vector<1x32xf32> to vector<2x32xf32>
    %110 = arith.addf %108, %109 : vector<2x32xf32>
    %c0_57 = arith.constant 0 : index
    %c0_58 = arith.constant 0 : index
    %c0_59 = arith.constant 0 : index
    %111 = vector.load %arg19[%c0_57, %c0_58, %c0_59] : memref<2x2x32xf32, #tpu.memory_space<vmem>>, vector<1x2x32xf32>
    %112 = vector.shape_cast %111 : vector<1x2x32xf32> to vector<2x32xf32>
    %113 = vector.shape_cast %110 : vector<2x32xf32> to vector<1x2x32xf32>
    tpu.vector_store %arg19[%c0_57, %c0_58, %c0_59], %113 {strides = array<i32>} : memref<2x2x32xf32, #tpu.memory_space<vmem>>, vector<1x2x32xf32>,
    %cst_60 = arith.constant dense<0.000000e+00> : vector<2x32xf32>
    %114 = tpu.matmul %107, %79, %cst_60 {dimension_numbers = #tpu.dot_dimension_numbers<[1], [0], [0], [1], [0, 0, 1, 1], [], []>} : vector<2x16xf32>, vector<16x32xf32>, vector<2x32xf32> -> vector<2x32xf32>
    %115 = vector.broadcast %80 : vector<1x32xf32> to vector<2x32xf32>
    %116 = arith.addf %114, %115 : vector<2x32xf32>
    %c0_61 = arith.constant 0 : index
    %c0_62 = arith.constant 0 : index
    %c0_63 = arith.constant 0 : index
    %117 = vector.load %arg20[%c0_61, %c0_62, %c0_63] : memref<2x2x32xf32, #tpu.memory_space<vmem>>, vector<1x2x32xf32>
    %118 = vector.shape_cast %117 : vector<1x2x32xf32> to vector<2x32xf32>
    %119 = vector.shape_cast %116 : vector<2x32xf32> to vector<1x2x32xf32>
    tpu.vector_store %arg20[%c0_61, %c0_62, %c0_63], %119 {strides = array<i32>} : memref<2x2x32xf32, #tpu.memory_space<vmem>>, vector<1x2x32xf32>,
    %cst_64 = arith.constant dense<0.000000e+00> : vector<2x16xf32>
    %120 = tpu.matmul %107, %67, %cst_64 {dimension_numbers = #tpu.dot_dimension_numbers<[1], [0], [0], [1], [0, 0, 1, 1], [], []>} : vector<2x16xf32>, vector<16x16xf32>, vector<2x16xf32> -> vector<2x16xf32>
    %121 = arith.addf %120, %70 : vector<2x16xf32>
    %cst_65 = arith.constant dense<0.000000e+00> : vector<2xf32>
    %122 = vector.multi_reduction <add>, %121, %cst_65 [1] : vector<2x16xf32> to vector<2xf32>
    %123 = vector.shape_cast %122 : vector<2xf32> to vector<2x1xf32>
    %cst_66 = arith.constant 1.600000e+01 : f32
    %124 = vector.broadcast %cst_66 : f32 to vector<2x1xf32>
    %125 = arith.divf %123, %124 : vector<2x1xf32>
    %126 = arith.mulf %121, %121 : vector<2x16xf32>
    %cst_67 = arith.constant dense<0.000000e+00> : vector<2xf32>
    %127 = vector.multi_reduction <add>, %126, %cst_67 [1] : vector<2x16xf32> to vector<2xf32>
    %128 = vector.shape_cast %127 : vector<2xf32> to vector<2x1xf32>
    %cst_68 = arith.constant 1.600000e+01 : f32
    %129 = vector.broadcast %cst_68 : f32 to vector<2x1xf32>
    %130 = arith.divf %128, %129 : vector<2x1xf32>
    %131 = arith.mulf %125, %125 : vector<2x1xf32>
    %132 = arith.subf %130, %131 : vector<2x1xf32>
    %cst_69 = arith.constant 0.000000e+00 : f32
    %133 = vector.broadcast %cst_69 : f32 to vector<2x1xf32>
    %134 = arith.maximumf %132, %133 : vector<2x1xf32>
    %135 = vector.broadcast %125 : vector<2x1xf32> to vector<2x16xf32>
    %136 = arith.subf %121, %135 : vector<2x16xf32>
    %cst_70 = arith.constant 9.99999974E-6 : f32
    %137 = vector.broadcast %cst_70 : f32 to vector<2x1xf32>
    %138 = arith.addf %134, %137 : vector<2x1xf32>
    %139 = math.rsqrt %138 : vector<2x1xf32>
    %140 = vector.broadcast %139 : vector<2x1xf32> to vector<2x16xf32>
    %141 = arith.mulf %136, %140 : vector<2x16xf32>
    %142 = arith.mulf %141, %73 : vector<2x16xf32>
    %143 = arith.addf %142, %76 : vector<2x16xf32>
    %cst_71 = arith.constant 0.000000e+00 : f32
    %144 = vector.broadcast %cst_71 : f32 to vector<2x16xf32>
    %145 = arith.maximumf %143, %144 : vector<2x16xf32>
    %146 = arith.addf %107, %145 : vector<2x16xf32>
    %cst_72 = arith.constant dense<0.000000e+00> : vector<2x32xf32>
    %147 = tpu.matmul %146, %77, %cst_72 {dimension_numbers = #tpu.dot_dimension_numbers<[1], [0], [0], [1], [0, 0, 1, 1], [], []>} : vector<2x16xf32>, vector<16x32xf32>, vector<2x32xf32> -> vector<2x32xf32>
    %148 = vector.broadcast %78 : vector<1x32xf32> to vector<2x32xf32>
    %149 = arith.addf %147, %148 : vector<2x32xf32>
    %c1 = arith.constant 1 : index
    %c0_73 = arith.constant 0 : index
    %c0_74 = arith.constant 0 : index
    %150 = vector.load %arg19[%c1, %c0_73, %c0_74] : memref<2x2x32xf32, #tpu.memory_space<vmem>>, vector<1x2x32xf32>
    %151 = vector.shape_cast %150 : vector<1x2x32xf32> to vector<2x32xf32>
    %152 = vector.shape_cast %149 : vector<2x32xf32> to vector<1x2x32xf32>
    tpu.vector_store %arg19[%c1, %c0_73, %c0_74], %152 {strides = array<i32>} : memref<2x2x32xf32, #tpu.memory_space<vmem>>, vector<1x2x32xf32>,
    %cst_75 = arith.constant dense<0.000000e+00> : vector<2x32xf32>
    %153 = tpu.matmul %146, %79, %cst_75 {dimension_numbers = #tpu.dot_dimension_numbers<[1], [0], [0], [1], [0, 0, 1, 1], [], []>} : vector<2x16xf32>, vector<16x32xf32>, vector<2x32xf32> -> vector<2x32xf32>
    %154 = vector.broadcast %80 : vector<1x32xf32> to vector<2x32xf32>
    %155 = arith.addf %153, %154 : vector<2x32xf32>
    %c1_76 = arith.constant 1 : index
    %c0_77 = arith.constant 0 : index
    %c0_78 = arith.constant 0 : index
    %156 = vector.load %arg20[%c1_76, %c0_77, %c0_78] : memref<2x2x32xf32, #tpu.memory_space<vmem>>, vector<1x2x32xf32>
    %157 = vector.shape_cast %156 : vector<1x2x32xf32> to vector<2x32xf32>
    %158 = vector.shape_cast %155 : vector<2x32xf32> to vector<1x2x32xf32>
    tpu.vector_store %arg20[%c1_76, %c0_77, %c0_78], %158 {strides = array<i32>} : memref<2x2x32xf32, #tpu.memory_space<vmem>>, vector<1x2x32xf32>,
    %c0_79 = arith.constant 0 : index
    %c0_80 = arith.constant 0 : index
    %159 = vector.load %arg18[%c0_79, %c0_80] : memref<2x16xf32, #tpu.memory_space<vmem>>, vector<2x16xf32>
    tpu.vector_store %arg18[%c0_79, %c0_80], %146 {strides = array<i32>} : memref<2x16xf32, #tpu.memory_space<vmem>>, vector<2x16xf32>,
    return
  }
  func.func @transform_0(%arg0: i32) -> (i32, i32) {
    %c0_i32 = arith.constant 0 : i32
    %c0_i32_0 = arith.constant 0 : i32
    %c0_i32_1 = arith.constant 0 : i32
    return %c0_i32, %c0_i32_0 : i32, i32
  }
  func.func @transform_1(%arg0: i32) -> (i32, i32) {
    %c0_i32 = arith.constant 0 : i32
    %c0_i32_0 = arith.constant 0 : i32
    %c0_i32_1 = arith.constant 0 : i32
    return %c0_i32, %c0_i32_0 : i32, i32
  }
  func.func @transform_2(%arg0: i32) -> (i32, i32) {
    %c0_i32 = arith.constant 0 : i32
    %c0_i32_0 = arith.constant 0 : i32
    %c0_i32_1 = arith.constant 0 : i32
    return %c0_i32, %c0_i32_0 : i32, i32
  }
  func.func @transform_3(%arg0: i32) -> (i32, i32) {
    %c0_i32 = arith.constant 0 : i32
    %c0_i32_0 = arith.constant 0 : i32
    %c0_i32_1 = arith.constant 0 : i32
    return %c0_i32, %c0_i32_0 : i32, i32
  }
  func.func @transform_4(%arg0: i32) -> (i32, i32) {
    %c0_i32 = arith.constant 0 : i32
    %c0_i32_0 = arith.constant 0 : i32
    %c0_i32_1 = arith.constant 0 : i32
    return %c0_i32, %c0_i32_0 : i32, i32
  }
  func.func @transform_5(%arg0: i32) -> (i32, i32) {
    %c0_i32 = arith.constant 0 : i32
    %c0_i32_0 = arith.constant 0 : i32
    %c0_i32_1 = arith.constant 0 : i32
    return %c0_i32, %c0_i32_0 : i32, i32
  }
  func.func @transform_6(%arg0: i32) -> (i32, i32) {
    %c0_i32 = arith.constant 0 : i32
    %c0_i32_0 = arith.constant 0 : i32
    %c0_i32_1 = arith.constant 0 : i32
    return %c0_i32, %c0_i32_0 : i32, i32
  }
  func.func @transform_7(%arg0: i32) -> (i32, i32) {
    %c0_i32 = arith.constant 0 : i32
    %c0_i32_0 = arith.constant 0 : i32
    %c0_i32_1 = arith.constant 0 : i32
    return %c0_i32, %c0_i32_0 : i32, i32
  }
  func.func @transform_8(%arg0: i32) -> (i32, i32) {
    %c0_i32 = arith.constant 0 : i32
    %c0_i32_0 = arith.constant 0 : i32
    %c0_i32_1 = arith.constant 0 : i32
    return %c0_i32, %c0_i32_0 : i32, i32
  }
  func.func @transform_9(%arg0: i32) -> (i32, i32) {
    %c0_i32 = arith.constant 0 : i32
    %c0_i32_0 = arith.constant 0 : i32
    %c0_i32_1 = arith.constant 0 : i32
    return %c0_i32, %c0_i32_0 : i32, i32
  }
  func.func @transform_10(%arg0: i32) -> (i32, i32) {
    %c0_i32 = arith.constant 0 : i32
    %c0_i32_0 = arith.constant 0 : i32
    %c0_i32_1 = arith.constant 0 : i32
    return %c0_i32, %c0_i32_0 : i32, i32
  }
  func.func @transform_11(%arg0: i32) -> (i32, i32) {
    %c0_i32 = arith.constant 0 : i32
    %c0_i32_0 = arith.constant 0 : i32
    %c0_i32_1 = arith.constant 0 : i32
    return %c0_i32, %c0_i32_0 : i32, i32
  }
  func.func @transform_12(%arg0: i32) -> (i32, i32) {
    %c0_i32 = arith.constant 0 : i32
    %c0_i32_0 = arith.constant 0 : i32
    %c0_i32_1 = arith.constant 0 : i32
    return %c0_i32, %c0_i32_0 : i32, i32
  }
  func.func @transform_13(%arg0: i32) -> (i32, i32) {
    %c0_i32 = arith.constant 0 : i32
    %c0_i32_0 = arith.constant 0 : i32
    %c0_i32_1 = arith.constant 0 : i32
    return %c0_i32, %c0_i32_0 : i32, i32
  }
  func.func @transform_14(%arg0: i32) -> (i32, i32) {
    %c0_i32 = arith.constant 0 : i32
    %c0_i32_0 = arith.constant 0 : i32
    %c0_i32_1 = arith.constant 0 : i32
    return %c0_i32, %c0_i32_0 : i32, i32
  }
  func.func @transform_15(%arg0: i32) -> (i32, i32) {
    %c0_i32 = arith.constant 0 : i32
    %c0_i32_0 = arith.constant 0 : i32
    %c0_i32_1 = arith.constant 0 : i32
    return %c0_i32, %c0_i32_0 : i32, i32
  }
  func.func @transform_16(%arg0: i32) -> (i32, i32) {
    %c0_i32 = arith.constant 0 : i32
    %c0_i32_0 = arith.constant 0 : i32
    %c0_i32_1 = arith.constant 0 : i32
    return %c0_i32, %c0_i32_0 : i32, i32
  }
  func.func @transform_17(%arg0: i32) -> (i32, i32) {
    %c0_i32 = arith.constant 0 : i32
    %c0_i32_0 = arith.constant 0 : i32
    %c0_i32_1 = arith.constant 0 : i32
    return %c0_i32, %c0_i32_0 : i32, i32
  }
  func.func @transform_18(%arg0: i32) -> (i32, i32, i32) {
    %c0_i32 = arith.constant 0 : i32
    %c0_i32_0 = arith.constant 0 : i32
    %c0_i32_1 = arith.constant 0 : i32
    %c0_i32_2 = arith.constant 0 : i32
    return %c0_i32, %c0_i32_0, %c0_i32_1 : i32, i32, i32
  }
  func.func @transform_19(%arg0: i32) -> (i32, i32, i32) {
    %c0_i32 = arith.constant 0 : i32
    %c0_i32_0 = arith.constant 0 : i32
    %c0_i32_1 = arith.constant 0 : i32
    %c0_i32_2 = arith.constant 0 : i32
    return %c0_i32, %c0_i32_0, %c0_i32_1 : i32, i32, i32
  }
}

</mosaic_0001>

<llo_original>
// kernel: tpu_custom_call.1
$region0: #{tpu_custom_call.1}
  #allocation0 [shape = 'u32[]', space=smem, size = 0x4, offset = 0x4, fixed_abs, tag = 'smem constant byte address 0x4 - core index']
  #allocation1 [shape = 'u32[72,128]{1,0:T(1,128)}', space=vmem, size = 0x9000, scoped, tag = 'internal scratch']
  %s0 = inlined_call_operand.hbm [shape: f32[2,16], index: 0, kind: input, shape index: {}]
  %s1 = inlined_call_operand.hbm [shape: f32[16,16], index: 1, kind: input, shape index: {}]
  %s2 = inlined_call_operand.vmem [shape: f32[1,16], index: 2, kind: input, shape index: {}]
  %s3 = inlined_call_operand.vmem [shape: f32[1,16], index: 3, kind: input, shape index: {}]
  %s4 = inlined_call_operand.vmem [shape: f32[1,16], index: 4, kind: input, shape index: {}]
  %s5 = inlined_call_operand.hbm [shape: f32[16,16], index: 5, kind: input, shape index: {}]
  %s6 = inlined_call_operand.vmem [shape: f32[1,16], index: 6, kind: input, shape index: {}]
  %s7 = inlined_call_operand.vmem [shape: f32[1,16], index: 7, kind: input, shape index: {}]
  %s8 = inlined_call_operand.vmem [shape: f32[1,16], index: 8, kind: input, shape index: {}]
  %s9 = inlined_call_operand.hbm [shape: f32[16,16], index: 9, kind: input, shape index: {}]
  %s10 = inlined_call_operand.vmem [shape: f32[1,16], index: 10, kind: input, shape index: {}]
  %s11 = inlined_call_operand.vmem [shape: f32[1,16], index: 11, kind: input, shape index: {}]
  %s12 = inlined_call_operand.vmem [shape: f32[1,16], index: 12, kind: input, shape index: {}]
  %s13 = inlined_call_operand.hbm [shape: f32[16,32], index: 13, kind: input, shape index: {}]
  %s14 = inlined_call_operand.vmem [shape: f32[1,32], index: 14, kind: input, shape index: {}]
  %s15 = inlined_call_operand.hbm [shape: f32[16,32], index: 15, kind: input, shape index: {}]
  %s16 = inlined_call_operand.vmem [shape: f32[1,32], index: 16, kind: input, shape index: {}]
  %s17 = inlined_call_operand.hbm [shape: f32[2,16], index: 17, kind: output, shape index: {0}]
  %s18 = inlined_call_operand.hbm [shape: f32[2,2,32], index: 18, kind: output, shape index: {1}]
  %s19 = inlined_call_operand.hbm [shape: f32[2,2,32], index: 19, kind: output, shape index: {2}]
  %20 = xla_tuple %s17, %s18, %s19
  %s21 = sld [smem:[#allocation0]]
  $region118: #{tpu_custom_call.1} parent=0
    _
  %s23 = ssub.s32 1, %s21
  %s24 = scalar_select 0, %s23, %s21
  $region1: #{tpu_custom_call.1} parent=0
    #allocation2 [shape = 'u8[1024]{0}', space=vmem, size = 0x400, scoped, tag = 'input window, operand 0, single buffered']
    #allocation3 [shape = 's32[1]{0}', space=sflag, size = 0x4, scoped, tag = 'scoped memory for tpu_custom_call.1']
    #allocation4 [shape = 's32[1]{0}', space=sflag, size = 0x4, scoped, tag = 'scoped memory for tpu_custom_call.1']
    #allocation5 [shape = 'u8[8192]{0}', space=vmem, size = 0x2000, scoped, tag = 'input window, operand 1, single buffered']
    #allocation6 [shape = 's32[1]{0}', space=sflag, size = 0x4, scoped, tag = 'scoped memory for tpu_custom_call.1']
    #allocation7 [shape = 'u8[8192]{0}', space=vmem, size = 0x2000, scoped, tag = 'input window, operand 5, single buffered']
    #allocation8 [shape = 'u8[8192]{0}', space=vmem, size = 0x2000, scoped, tag = 'input window, operand 9, single buffered']
    #allocation9 [shape = 's32[1]{0}', space=sflag, size = 0x4, scoped, tag = 'scoped memory for tpu_custom_call.1']
    #allocation10 [shape = 'u8[8192]{0}', space=vmem, size = 0x2000, scoped, tag = 'input window, operand 13, single buffered']
    #allocation11 [shape = 'u8[8192]{0}', space=vmem, size = 0x2000, scoped, tag = 'input window, operand 15, single buffered']
    #allocation12 [shape = 's32[1]{0}', space=sflag, size = 0x4, scoped, tag = 'scoped memory for tpu_custom_call.1']
    #allocation13 [shape = 'u8[1024]{0}', space=vmem, size = 0x400, scoped, tag = 'output window, operand 0, single buffered']
    #allocation14 [shape = 'u8[2048]{0}', space=vmem, size = 0x800, scoped, tag = 'output window, operand 1, single buffered']
    #allocation15 [shape = 's32[1]{0}', space=sflag, size = 0x4, scoped, tag = 'scoped memory for tpu_custom_call.1']
    #allocation16 [shape = 'u8[2048]{0}', space=vmem, size = 0x800, scoped, tag = 'output window, operand 2, single buffered']
    %25 = vsyncpa [#allocation3], 0
    %26 = vsyncpa [#allocation6], 0
    %27 = vsyncpa [#allocation9], 0
    %28 = vsyncpa [#allocation12], 0
    %29 = vsyncpa [#allocation4], 0
    %30 = vsyncpa [#allocation15], 0
    // Predicated region
    $region2: #{tpu_custom_call.1} parent=1 // pred_check
      _
    $region3: #{tpu_custom_call.1} parent=1 // pred_check_branch
      %32 = sbr.rel (0) target = $region5
    $region4: #{tpu_custom_call.1} parent=1 // pred_region
      %34 = vsyncadd [#allocation3], 0
      %s36 = sshll.u32 %s0, 4
      %s37 = int_to_ptr.hbm [resolvable:$true] %s36
      %s38 = sshll.u32 [#allocation2], 4
      %s39 = int_to_ptr.vmem [resolvable:$true] %s38
      %41 = dma.hbm_to_vmem [thread:$0]  %s37, 32, %s39, [#allocation3]
    $region5: #{tpu_custom_call.1} parent=1 // pred_fallthru
      _
    // Predicated region
    $region6: #{tpu_custom_call.1} parent=1 // pred_check
      _
    $region7: #{tpu_custom_call.1} parent=1 // pred_check_branch
      %43 = sbr.rel (0) target = $region9
    $region8: #{tpu_custom_call.1} parent=1 // pred_region
      %45 = vsyncadd [#allocation6], 0
      %s46 = sshll.u32 %s1, 4
      %s47 = int_to_ptr.hbm [resolvable:$true] %s46
      %s48 = sshll.u32 [#allocation5], 4
      %s49 = int_to_ptr.vmem [resolvable:$true] %s48
      %54 = dma.hbm_to_vmem [thread:$0]  %s47, 256, %s49, [#allocation6], 128, 128, 8
    $region9: #{tpu_custom_call.1} parent=1 // pred_fallthru
      _
    // Predicated region
    $region10: #{tpu_custom_call.1} parent=1 // pred_check
      _
    $region11: #{tpu_custom_call.1} parent=1 // pred_check_branch
      %56 = sbr.rel (0) target = $region13
    $region12: #{tpu_custom_call.1} parent=1 // pred_region
      _
    $region13: #{tpu_custom_call.1} parent=1 // pred_fallthru
      _
    // Predicated region
    $region14: #{tpu_custom_call.1} parent=1 // pred_check
      _
    $region15: #{tpu_custom_call.1} parent=1 // pred_check_branch
      %58 = sbr.rel (0) target = $region17
    $region16: #{tpu_custom_call.1} parent=1 // pred_region
      _
    $region17: #{tpu_custom_call.1} parent=1 // pred_fallthru
      _
    // Predicated region
    $region18: #{tpu_custom_call.1} parent=1 // pred_check
      _
    $region19: #{tpu_custom_call.1} parent=1 // pred_check_branch
      %60 = sbr.rel (0) target = $region21
    $region20: #{tpu_custom_call.1} parent=1 // pred_region
      _
    $region21: #{tpu_custom_call.1} parent=1 // pred_fallthru
      _
    // Predicated region
    $region22: #{tpu_custom_call.1} parent=1 // pred_check
      _
    $region23: #{tpu_custom_call.1} parent=1 // pred_check_branch
      %62 = sbr.rel (0) target = $region25
    $region24: #{tpu_custom_call.1} parent=1 // pred_region
      %64 = vsyncadd [#allocation6], 0
      %s65 = sshll.u32 %s5, 4
      %s66 = int_to_ptr.hbm [resolvable:$true] %s65
      %s67 = sshll.u32 [#allocation7], 4
      %s68 = int_to_ptr.vmem [resolvable:$true] %s67
      %73 = dma.hbm_to_vmem [thread:$0]  %s66, 256, %s68, [#allocation6], 128, 128, 8
    $region25: #{tpu_custom_call.1} parent=1 // pred_fallthru
      _
    // Predicated region
    $region26: #{tpu_custom_call.1} parent=1 // pred_check
      _
    $region27: #{tpu_custom_call.1} parent=1 // pred_check_branch
      %75 = sbr.rel (0) target = $region29
    $region28: #{tpu_custom_call.1} parent=1 // pred_region
      _
    $region29: #{tpu_custom_call.1} parent=1 // pred_fallthru
      _
    // Predicated region
    $region30: #{tpu_custom_call.1} parent=1 // pred_check
      _
    $region31: #{tpu_custom_call.1} parent=1 // pred_check_branch
      %77 = sbr.rel (0) target = $region33
    $region32: #{tpu_custom_call.1} parent=1 // pred_region
      _
    $region33: #{tpu_custom_call.1} parent=1 // pred_fallthru
      _
    // Predicated region
    $region34: #{tpu_custom_call.1} parent=1 // pred_check
      _
    $region35: #{tpu_custom_call.1} parent=1 // pred_check_branch
      %79 = sbr.rel (0) target = $region37
    $region36: #{tpu_custom_call.1} parent=1 // pred_region
      _
    $region37: #{tpu_custom_call.1} parent=1 // pred_fallthru
      _
    // Predicated region
    $region38: #{tpu_custom_call.1} parent=1 // pred_check
      _
    $region39: #{tpu_custom_call.1} parent=1 // pred_check_branch
      %81 = sbr.rel (0) target = $region41
    $region40: #{tpu_custom_call.1} parent=1 // pred_region
      %83 = vsyncadd [#allocation9], 0
      %s84 = sshll.u32 %s9, 4
      %s85 = int_to_ptr.hbm [resolvable:$true] %s84
      %s86 = sshll.u32 [#allocation8], 4
      %s87 = int_to_ptr.vmem [resolvable:$true] %s86
      %92 = dma.hbm_to_vmem [thread:$0]  %s85, 256, %s87, [#allocation9], 128, 128, 8
    $region41: #{tpu_custom_call.1} parent=1 // pred_fallthru
      _
    // Predicated region
    $region42: #{tpu_custom_call.1} parent=1 // pred_check
      _
    $region43: #{tpu_custom_call.1} parent=1 // pred_check_branch
      %94 = sbr.rel (0) target = $region45
    $region44: #{tpu_custom_call.1} parent=1 // pred_region
      _
    $region45: #{tpu_custom_call.1} parent=1 // pred_fallthru
      _
    // Predicated region
    $region46: #{tpu_custom_call.1} parent=1 // pred_check
      _
    $region47: #{tpu_custom_call.1} parent=1 // pred_check_branch
      %96 = sbr.rel (0) target = $region49
    $region48: #{tpu_custom_call.1} parent=1 // pred_region
      _
    $region49: #{tpu_custom_call.1} parent=1 // pred_fallthru
      _
    // Predicated region
    $region50: #{tpu_custom_call.1} parent=1 // pred_check
      _
    $region51: #{tpu_custom_call.1} parent=1 // pred_check_branch
      %98 = sbr.rel (0) target = $region53
    $region52: #{tpu_custom_call.1} parent=1 // pred_region
      _
    $region53: #{tpu_custom_call.1} parent=1 // pred_fallthru
      _
    // Predicated region
    $region54: #{tpu_custom_call.1} parent=1 // pred_check
      _
    $region55: #{tpu_custom_call.1} parent=1 // pred_check_branch
      %100 = sbr.rel (0) target = $region57
    $region56: #{tpu_custom_call.1} parent=1 // pred_region
      %102 = vsyncadd [#allocation9], 0
      %s103 = sshll.u32 %s13, 4
      %s104 = int_to_ptr.hbm [resolvable:$true] %s103
      %s105 = sshll.u32 [#allocation10], 4
      %s106 = int_to_ptr.vmem [resolvable:$true] %s105
      %111 = dma.hbm_to_vmem [thread:$0]  %s104, 256, %s106, [#allocation9], 128, 128, 8
    $region57: #{tpu_custom_call.1} parent=1 // pred_fallthru
      _
    // Predicated region
    $region58: #{tpu_custom_call.1} parent=1 // pred_check
      _
    $region59: #{tpu_custom_call.1} parent=1 // pred_check_branch
      %113 = sbr.rel (0) target = $region61
    $region60: #{tpu_custom_call.1} parent=1 // pred_region
      _
    $region61: #{tpu_custom_call.1} parent=1 // pred_fallthru
      _
    // Predicated region
    $region62: #{tpu_custom_call.1} parent=1 // pred_check
      _
    $region63: #{tpu_custom_call.1} parent=1 // pred_check_branch
      %115 = sbr.rel (0) target = $region65
    $region64: #{tpu_custom_call.1} parent=1 // pred_region
      %117 = vsyncadd [#allocation12], 0
      %s118 = sshll.u32 %s15, 4
      %s119 = int_to_ptr.hbm [resolvable:$true] %s118
      %s120 = sshll.u32 [#allocation11], 4
      %s121 = int_to_ptr.vmem [resolvable:$true] %s120
      %126 = dma.hbm_to_vmem [thread:$0]  %s119, 256, %s121, [#allocation12], 128, 128, 8
    $region65: #{tpu_custom_call.1} parent=1 // pred_fallthru
      _
    // Predicated region
    $region66: #{tpu_custom_call.1} parent=1 // pred_check
      _
    $region67: #{tpu_custom_call.1} parent=1 // pred_check_branch
      %128 = sbr.rel (0) target = $region69
    $region68: #{tpu_custom_call.1} parent=1 // pred_region
      _
    $region69: #{tpu_custom_call.1} parent=1 // pred_fallthru
      _
    // Predicated region
    $region70: #{tpu_custom_call.1} parent=1 // pred_check
      _
    $region71: #{tpu_custom_call.1} parent=1 // pred_check_branch
      %130 = sbr.rel (0) target = $region73
    $region72: #{tpu_custom_call.1} parent=1 // pred_region
      %132 = dma.done [#allocation3], 32
    $region73: #{tpu_custom_call.1} parent=1 // pred_fallthru
      _
    // Predicated region
    $region74: #{tpu_custom_call.1} parent=1 // pred_check
      _
    $region75: #{tpu_custom_call.1} parent=1 // pred_check_branch
      %134 = sbr.rel (0) target = $region77
    $region76: #{tpu_custom_call.1} parent=1 // pred_region
      %136 = dma.done [#allocation6], 256
    $region77: #{tpu_custom_call.1} parent=1 // pred_fallthru
      _
    // Predicated region
    $region78: #{tpu_custom_call.1} parent=1 // pred_check
      _
    $region79: #{tpu_custom_call.1} parent=1 // pred_check_branch
      %138 = sbr.rel (0) target = $region81
    $region80: #{tpu_custom_call.1} parent=1 // pred_region
      %140 = dma.done [#allocation6], 256
    $region81: #{tpu_custom_call.1} parent=1 // pred_fallthru
      _
    // Predicated region
    $region82: #{tpu_custom_call.1} parent=1 // pred_check
      _
    $region83: #{tpu_custom_call.1} parent=1 // pred_check_branch
      %142 = sbr.rel (0) target = $region85
    $region84: #{tpu_custom_call.1} parent=1 // pred_region
      %144 = dma.done [#allocation9], 256
    $region85: #{tpu_custom_call.1} parent=1 // pred_fallthru
      _
    // Predicated region
    $region86: #{tpu_custom_call.1} parent=1 // pred_check
      _
    $region87: #{tpu_custom_call.1} parent=1 // pred_check_branch
      %146 = sbr.rel (0) target = $region89
    $region88: #{tpu_custom_call.1} parent=1 // pred_region
      %148 = dma.done [#allocation9], 256
    $region89: #{tpu_custom_call.1} parent=1 // pred_fallthru
      _
    // Predicated region
    $region90: #{tpu_custom_call.1} parent=1 // pred_check
      _
    $region91: #{tpu_custom_call.1} parent=1 // pred_check_branch
      %150 = sbr.rel (0) target = $region93
    $region92: #{tpu_custom_call.1} parent=1 // pred_region
      %152 = dma.done [#allocation12], 256
    $region93: #{tpu_custom_call.1} parent=1 // pred_fallthru
      _
    %v153 = vld [vmem:[#allocation2] sm:$0x3]
    %v154 = vld [vmem:[#allocation5] sm:$0xff]
    %v155 = vld [vmem:[#allocation5 + $0x8] sm:$0xff]
    %v156 = vld [vmem:[%s2] sm:$0x1]
    %v158 = vperm.slane %v156, 0
    %vm160 = vcmask 130048
    %v162 = vsel %vm160, %v153, 0
    %164 = vmatpush.msra.mxu0 0.0
    %165 = vmatpush.msra.mxu0 0.0
    %166 = vmatpush.msra.mxu0 0.0
    %167 = vmatpush.msra.mxu0 0.0
    %168 = vmatpush.msra.mxu0 0.0
    %169 = vmatpush.msra.mxu0 0.0
    %170 = vmatpush.msra.mxu0 0.0
    %171 = vmatpush.msra.mxu0 0.0
    %172 = vmatpush.msra.mxu0 0.0
    %173 = vmatpush.msra.mxu0 0.0
    %174 = vmatpush.msra.mxu0 0.0
    %175 = vmatpush.msra.mxu0 0.0
    %176 = vmatpush.msra.mxu0 0.0
    %177 = vmatpush.msra.mxu0 0.0
    %178 = vmatpush.msra.mxu0 %v155
    %179 = vmatpush.msra.mxu0 %v154
    %180 = vmatmul.f32.gmra.mxu0 %v162
    %v181 = vpop.f32.mrf.mxu0
    %v182 = vadd.f32 %v158, %v181
    %183 = vdwg.mxu0
    %v184 = vld [vmem:[%s3] sm:$0x1]
    %v185 = vld [vmem:[%s4] sm:$0x1]
    %vm186 = vcmask 123904
    %v187 = vsel %vm186, %v182, 0.0
    %188 = vadd.xlane.f32.xlu0 %v187
    %v189 = vpop.xlane.xlu0 %188
    %v190 = vrcp.pop 16.0
    %v191 = vmul.f32 16.0, %v190
    %v192 = vsub.f32 1.0, %v191
    %v193 = vmul.f32 %v190, %v192
    %v194 = vadd.f32 %v190, %v193
    %vm195 = vweird.f32 %v190
    %v196 = vsel %vm195, %v190, %v194
    %v197 = vmul.f32 %v189, %v196
    %v198 = vmul.f32 %v182, %v182
    %v199 = vsel %vm186, %v198, 0.0
    %200 = vadd.xlane.f32.xlu0 %v199
    %v201 = vpop.xlane.xlu0 %200
    %v202 = vmul.f32 %v201, %v196
    %v203 = vmul.f32 %v197, %v197
    %v204 = vsub.f32 %v202, %v203
    %v205 = vmax.f32 %v204, 0.0
    %v206 = vsub.f32 %v182, %v197
    %v207 = vadd.f32 %v205, 1e-05
    %v208 = vrsqrt.pop %v207
    %v209 = vmul.f32 %v208, %v207
    %v210 = vmul.f32 %v209, %v208
    %v211 = vmul.f32 0.5, %v210
    %v212 = vsub.f32 1.5, %v211
    %v213 = vmul.f32 %v208, %v212
    %vm214 = vweird.f32 %v207
    %vm215 = vweird.f32 %v208
    %vm216 = vmor %vm214, %vm215
    %v217 = vsel %vm216, %v208, %v213
    %v218 = vmul.f32 %v206, %v217
    %v220 = vperm.slane %v184, 0
    %v222 = vmul.f32 %v218, %v220
    %v224 = vperm.slane %v185, 0
    %v226 = vadd.f32 %v222, %v224
    %v227 = vmax.f32 %v226, 0.0
    %v228 = vld [vmem:[#allocation7] sm:$0xff]
    %v229 = vld [vmem:[#allocation7 + $0x8] sm:$0xff]
    %v230 = vld [vmem:[%s6] sm:$0x1]
    %v232 = vperm.slane %v230, 0
    %v235 = vsel %vm160, %v227, 0
    %237 = vmatpush.msra.mxu0 0.0
    %238 = vmatpush.msra.mxu0 0.0
    %239 = vmatpush.msra.mxu0 0.0
    %240 = vmatpush.msra.mxu0 0.0
    %241 = vmatpush.msra.mxu0 0.0
    %242 = vmatpush.msra.mxu0 0.0
    %243 = vmatpush.msra.mxu0 0.0
    %244 = vmatpush.msra.mxu0 0.0
    %245 = vmatpush.msra.mxu0 0.0
    %246 = vmatpush.msra.mxu0 0.0
    %247 = vmatpush.msra.mxu0 0.0
    %248 = vmatpush.msra.mxu0 0.0
    %249 = vmatpush.msra.mxu0 0.0
    %250 = vmatpush.msra.mxu0 0.0
    %251 = vmatpush.msra.mxu0 %v229
    %252 = vmatpush.msra.mxu0 %v228
    %253 = vmatmul.f32.gmra.mxu0 %v235
    %v254 = vpop.f32.mrf.mxu0
    %v255 = vadd.f32 %v232, %v254
    %256 = vdwg.mxu0
    %v257 = vld [vmem:[%s7] sm:$0x1]
    %v258 = vld [vmem:[%s8] sm:$0x1]
    %v259 = vsel %vm186, %v255, 0.0
    %260 = vadd.xlane.f32.xlu0 %v259
    %v261 = vpop.xlane.xlu0 %260
    %v262 = vmul.f32 %v261, %v196
    %v263 = vmul.f32 %v255, %v255
    %v264 = vsel %vm186, %v263, 0.0
    %265 = vadd.xlane.f32.xlu0 %v264
    %v266 = vpop.xlane.xlu0 %265
    %v267 = vmul.f32 %v266, %v196
    %v268 = vmul.f32 %v262, %v262
    %v269 = vsub.f32 %v267, %v268
    %v270 = vmax.f32 %v269, 0.0
    %v271 = vsub.f32 %v255, %v262
    %v272 = vadd.f32 %v270, 1e-05
    %v273 = vrsqrt.pop %v272
    %v274 = vmul.f32 %v273, %v272
    %v275 = vmul.f32 %v274, %v273
    %v276 = vmul.f32 0.5, %v275
    %v277 = vsub.f32 1.5, %v276
    %v278 = vmul.f32 %v273, %v277
    %vm279 = vweird.f32 %v272
    %vm280 = vweird.f32 %v273
    %vm281 = vmor %vm279, %vm280
    %v282 = vsel %vm281, %v273, %v278
    %v283 = vmul.f32 %v271, %v282
    %v285 = vperm.slane %v257, 0
    %v287 = vmul.f32 %v283, %v285
    %v289 = vperm.slane %v258, 0
    %v291 = vadd.f32 %v287, %v289
    %v292 = vmax.f32 %v291, 0.0
    %v293 = vld [vmem:[#allocation8] sm:$0xff]
    %v294 = vld [vmem:[#allocation8 + $0x8] sm:$0xff]
    %v295 = vld [vmem:[%s10] sm:$0x1]
    %v297 = vperm.slane %v295, 0
    %v299 = vld [vmem:[%s11] sm:$0x1]
    %v301 = vperm.slane %v299, 0
    %v303 = vld [vmem:[%s12] sm:$0x1]
    %v305 = vperm.slane %v303, 0
    %v307 = vld [vmem:[#allocation10] sm:$0xff]
    %v308 = vld [vmem:[#allocation10 + $0x8] sm:$0xff]
    %v309 = vld [vmem:[%s14] sm:$0x1]
    %v310 = vld [vmem:[#allocation11] sm:$0xff]
    %v311 = vld [vmem:[#allocation11 + $0x8] sm:$0xff]
    %v312 = vld [vmem:[%s16] sm:$0x1]
    %v314 = vsel %vm160, %v292, 0
    %316 = vmatpush.msra.mxu0 0.0
    %317 = vmatpush.msra.mxu0 0.0
    %318 = vmatpush.msra.mxu0 0.0
    %319 = vmatpush.msra.mxu0 0.0
    %320 = vmatpush.msra.mxu0 0.0
    %321 = vmatpush.msra.mxu0 0.0
    %322 = vmatpush.msra.mxu0 0.0
    %323 = vmatpush.msra.mxu0 0.0
    %324 = vmatpush.msra.mxu0 0.0
    %325 = vmatpush.msra.mxu0 0.0
    %326 = vmatpush.msra.mxu0 0.0
    %327 = vmatpush.msra.mxu0 0.0
    %328 = vmatpush.msra.mxu0 0.0
    %329 = vmatpush.msra.mxu0 0.0
    %330 = vmatpush.msra.mxu0 %v294
    %331 = vmatpush.msra.mxu0 %v293
    %332 = vmatmul.f32.gmra.mxu0 %v314
    %v333 = vpop.f32.mrf.mxu0
    %v334 = vadd.f32 %v297, %v333
    %335 = vdwg.mxu0
    %v336 = vsel %vm186, %v334, 0.0
    %337 = vadd.xlane.f32.xlu0 %v336
    %v338 = vpop.xlane.xlu0 %337
    %v339 = vmul.f32 %v338, %v196
    %v340 = vmul.f32 %v334, %v334
    %v341 = vsel %vm186, %v340, 0.0
    %342 = vadd.xlane.f32.xlu0 %v341
    %v343 = vpop.xlane.xlu0 %342
    %v344 = vmul.f32 %v343, %v196
    %v345 = vmul.f32 %v339, %v339
    %v346 = vsub.f32 %v344, %v345
    %v347 = vmax.f32 %v346, 0.0
    %v348 = vsub.f32 %v334, %v339
    %v349 = vadd.f32 %v347, 1e-05
    %v350 = vrsqrt.pop %v349
    %v351 = vmul.f32 %v350, %v349
    %v352 = vmul.f32 %v351, %v350
    %v353 = vmul.f32 0.5, %v352
    %v354 = vsub.f32 1.5, %v353
    %v355 = vmul.f32 %v350, %v354
    %vm356 = vweird.f32 %v349
    %vm357 = vweird.f32 %v350
    %vm358 = vmor %vm356, %vm357
    %v359 = vsel %vm358, %v350, %v355
    %v360 = vmul.f32 %v348, %v359
    %v361 = vmul.f32 %v360, %v301
    %v362 = vadd.f32 %v361, %v305
    %v363 = vmax.f32 %v362, 0.0
    %v364 = vadd.f32 %v292, %v363
    %v366 = vperm.slane %v309, 0
    %v369 = vsel %vm160, %v364, 0
    %371 = vmatpush.msra.mxu0 0.0
    %372 = vmatpush.msra.mxu0 0.0
    %373 = vmatpush.msra.mxu0 0.0
    %374 = vmatpush.msra.mxu0 0.0
    %375 = vmatpush.msra.mxu0 0.0
    %376 = vmatpush.msra.mxu0 0.0
    %377 = vmatpush.msra.mxu0 0.0
    %378 = vmatpush.msra.mxu0 0.0
    %379 = vmatpush.msra.mxu0 0.0
    %380 = vmatpush.msra.mxu0 0.0
    %381 = vmatpush.msra.mxu0 0.0
    %382 = vmatpush.msra.mxu0 0.0
    %383 = vmatpush.msra.mxu0 0.0
    %384 = vmatpush.msra.mxu0 0.0
    %385 = vmatpush.msra.mxu0 %v308
    %386 = vmatpush.msra.mxu0 %v307
    %387 = vmatmul.f32.gmra.mxu0 %v369
    %v388 = vpop.f32.mrf.mxu0
    %v389 = vadd.f32 %v366, %v388
    %390 = vdwg.mxu0
    %vm391 = vcmask 254976
    %392 = vst.msk [vmem:[#allocation14] sm:$0x3] %vm391, %v389
    %v394 = vperm.slane %v312, 0
    %396 = vmatpush.msra.mxu0 0.0
    %397 = vmatpush.msra.mxu0 0.0
    %398 = vmatpush.msra.mxu0 0.0
    %399 = vmatpush.msra.mxu0 0.0
    %400 = vmatpush.msra.mxu0 0.0
    %401 = vmatpush.msra.mxu0 0.0
    %402 = vmatpush.msra.mxu0 0.0
    %403 = vmatpush.msra.mxu0 0.0
    %404 = vmatpush.msra.mxu0 0.0
    %405 = vmatpush.msra.mxu0 0.0
    %406 = vmatpush.msra.mxu0 0.0
    %407 = vmatpush.msra.mxu0 0.0
    %408 = vmatpush.msra.mxu0 0.0
    %409 = vmatpush.msra.mxu0 0.0
    %410 = vmatpush.msra.mxu0 %v311
    %411 = vmatpush.msra.mxu0 %v310
    %412 = vmatmul.f32.gmra.mxu0 %v369
    %v413 = vpop.f32.mrf.mxu0
    %v414 = vadd.f32 %v394, %v413
    %415 = vdwg.mxu0
    %416 = vst.msk [vmem:[#allocation16] sm:$0x3] %vm391, %v414
    %417 = vmatpush.msra.mxu0 0.0
    %418 = vmatpush.msra.mxu0 0.0
    %419 = vmatpush.msra.mxu0 0.0
    %420 = vmatpush.msra.mxu0 0.0
    %421 = vmatpush.msra.mxu0 0.0
    %422 = vmatpush.msra.mxu0 0.0
    %423 = vmatpush.msra.mxu0 0.0
    %424 = vmatpush.msra.mxu0 0.0
    %425 = vmatpush.msra.mxu0 0.0
    %426 = vmatpush.msra.mxu0 0.0
    %427 = vmatpush.msra.mxu0 0.0
    %428 = vmatpush.msra.mxu0 0.0
    %429 = vmatpush.msra.mxu0 0.0
    %430 = vmatpush.msra.mxu0 0.0
    %431 = vmatpush.msra.mxu0 %v294
    %432 = vmatpush.msra.mxu0 %v293
    %433 = vmatmul.f32.gmra.mxu0 %v369
    %v434 = vpop.f32.mrf.mxu0
    %v435 = vadd.f32 %v297, %v434
    %436 = vdwg.mxu0
    %v437 = vsel %vm186, %v435, 0.0
    %438 = vadd.xlane.f32.xlu0 %v437
    %v439 = vpop.xlane.xlu0 %438
    %v440 = vmul.f32 %v439, %v196
    %v441 = vmul.f32 %v435, %v435
    %v442 = vsel %vm186, %v441, 0.0
    %443 = vadd.xlane.f32.xlu0 %v442
    %v444 = vpop.xlane.xlu0 %443
    %v445 = vmul.f32 %v444, %v196
    %v446 = vmul.f32 %v440, %v440
    %v447 = vsub.f32 %v445, %v446
    %v448 = vmax.f32 %v447, 0.0
    %v449 = vsub.f32 %v435, %v440
    %v450 = vadd.f32 %v448, 1e-05
    %v451 = vrsqrt.pop %v450
    %v452 = vmul.f32 %v451, %v450
    %v453 = vmul.f32 %v452, %v451
    %v454 = vmul.f32 0.5, %v453
    %v455 = vsub.f32 1.5, %v454
    %v456 = vmul.f32 %v451, %v455
    %vm457 = vweird.f32 %v450
    %vm458 = vweird.f32 %v451
    %vm459 = vmor %vm457, %vm458
    %v460 = vsel %vm459, %v451, %v456
    %v461 = vmul.f32 %v449, %v460
    %v462 = vmul.f32 %v461, %v301
    %v463 = vadd.f32 %v462, %v305
    %v464 = vmax.f32 %v463, 0.0
    %v465 = vadd.f32 %v364, %v464
    %v467 = vsel %vm160, %v465, 0
    %469 = vmatpush.msra.mxu0 0.0
    %470 = vmatpush.msra.mxu0 0.0
    %471 = vmatpush.msra.mxu0 0.0
    %472 = vmatpush.msra.mxu0 0.0
    %473 = vmatpush.msra.mxu0 0.0
    %474 = vmatpush.msra.mxu0 0.0
    %475 = vmatpush.msra.mxu0 0.0
    %476 = vmatpush.msra.mxu0 0.0
    %477 = vmatpush.msra.mxu0 0.0
    %478 = vmatpush.msra.mxu0 0.0
    %479 = vmatpush.msra.mxu0 0.0
    %480 = vmatpush.msra.mxu0 0.0
    %481 = vmatpush.msra.mxu0 0.0
    %482 = vmatpush.msra.mxu0 0.0
    %483 = vmatpush.msra.mxu0 %v308
    %484 = vmatpush.msra.mxu0 %v307
    %485 = vmatmul.f32.gmra.mxu0 %v467
    %v486 = vpop.f32.mrf.mxu0
    %v487 = vadd.f32 %v366, %v486
    %488 = vdwg.mxu0
    %s489 = scalar_lea.vmem [#allocation14], 2
    %490 = vst.msk [vmem:[%s489] sm:$0x3] %vm391, %v487
    %491 = vmatpush.msra.mxu0 0.0
    %492 = vmatpush.msra.mxu0 0.0
    %493 = vmatpush.msra.mxu0 0.0
    %494 = vmatpush.msra.mxu0 0.0
    %495 = vmatpush.msra.mxu0 0.0
    %496 = vmatpush.msra.mxu0 0.0
    %497 = vmatpush.msra.mxu0 0.0
    %498 = vmatpush.msra.mxu0 0.0
    %499 = vmatpush.msra.mxu0 0.0
    %500 = vmatpush.msra.mxu0 0.0
    %501 = vmatpush.msra.mxu0 0.0
    %502 = vmatpush.msra.mxu0 0.0
    %503 = vmatpush.msra.mxu0 0.0
    %504 = vmatpush.msra.mxu0 0.0
    %505 = vmatpush.msra.mxu0 %v311
    %506 = vmatpush.msra.mxu0 %v310
    %507 = vmatmul.f32.gmra.mxu0 %v467
    %v508 = vpop.f32.mrf.mxu0
    %v509 = vadd.f32 %v394, %v508
    %510 = vdwg.mxu0
    %s511 = scalar_lea.vmem [#allocation16], 2
    %512 = vst.msk [vmem:[%s511] sm:$0x3] %vm391, %v509
    %513 = vst.msk [vmem:[#allocation13] sm:$0x3] %vm186, %v465
    // Predicated region
    $region94: #{tpu_custom_call.1} parent=1 // pred_check
      _
    $region95: #{tpu_custom_call.1} parent=1 // pred_check_branch
      %515 = sbr.rel (0) target = $region97
    $region96: #{tpu_custom_call.1} parent=1 // pred_region
      %517 = vsyncadd [#allocation4], 0
      %s519 = sshll.u32 [#allocation13], 4
      %s520 = int_to_ptr.vmem [resolvable:$true] %s519
      %s521 = sshll.u32 %s17, 4
      %s522 = int_to_ptr.hbm [resolvable:$true] %s521
      %524 = dma.vmem_to_hbm [thread:$0]  %s520, 32, %s522, [#allocation4]
    $region97: #{tpu_custom_call.1} parent=1 // pred_fallthru
      _
    // Predicated region
    $region98: #{tpu_custom_call.1} parent=1 // pred_check
      _
    $region99: #{tpu_custom_call.1} parent=1 // pred_check_branch
      %526 = sbr.rel (0) target = $region101
    $region100: #{tpu_custom_call.1} parent=1 // pred_region
      %528 = vsyncadd [#allocation15], 0
      %s529 = sshll.u32 [#allocation14], 4
      %s530 = int_to_ptr.vmem [resolvable:$true] %s529
      %s531 = sshll.u32 %s18, 4
      %s532 = int_to_ptr.hbm [resolvable:$true] %s531
      %537 = dma.vmem_to_hbm [thread:$0]  %s530, 64, %s532, [#allocation15], 32, 32, 2
    $region101: #{tpu_custom_call.1} parent=1 // pred_fallthru
      _
    // Predicated region
    $region102: #{tpu_custom_call.1} parent=1 // pred_check
      _
    $region103: #{tpu_custom_call.1} parent=1 // pred_check_branch
      %539 = sbr.rel (0) target = $region105
    $region104: #{tpu_custom_call.1} parent=1 // pred_region
      %541 = vsyncadd [#allocation15], 0
      %s542 = sshll.u32 [#allocation16], 4
      %s543 = int_to_ptr.vmem [resolvable:$true] %s542
      %s544 = sshll.u32 %s19, 4
      %s545 = int_to_ptr.hbm [resolvable:$true] %s544
      %550 = dma.vmem_to_hbm [thread:$0]  %s543, 64, %s545, [#allocation15], 32, 32, 2
    $region105: #{tpu_custom_call.1} parent=1 // pred_fallthru
      _
    // Predicated region
    $region106: #{tpu_custom_call.1} parent=1 // pred_check
      _
    $region107: #{tpu_custom_call.1} parent=1 // pred_check_branch
      %552 = sbr.rel (0) target = $region109
    $region108: #{tpu_custom_call.1} parent=1 // pred_region
      %554 = dma.done [#allocation4], 32
    $region109: #{tpu_custom_call.1} parent=1 // pred_fallthru
      _
    // Predicated region
    $region110: #{tpu_custom_call.1} parent=1 // pred_check
      _
    $region111: #{tpu_custom_call.1} parent=1 // pred_check_branch
      %556 = sbr.rel (0) target = $region113
    $region112: #{tpu_custom_call.1} parent=1 // pred_region
      %558 = dma.done [#allocation15], 64
    $region113: #{tpu_custom_call.1} parent=1 // pred_fallthru
      _
    // Predicated region
    $region114: #{tpu_custom_call.1} parent=1 // pred_check
      _
    $region115: #{tpu_custom_call.1} parent=1 // pred_check_branch
      %560 = sbr.rel (0) target = $region117
    $region116: #{tpu_custom_call.1} parent=1 // pred_region
      %562 = dma.done [#allocation15], 64
    $region117: #{tpu_custom_call.1} parent=1 // pred_fallthru
      _
    %563 = vsyncpa [#allocation3], 1
    %564 = vsyncpa [#allocation6], 1
    %565 = vsyncpa [#allocation9], 1
    %566 = vsyncpa [#allocation12], 1
    %567 = vsyncpa [#allocation4], 1
    %568 = vsyncpa [#allocation15], 1

</llo_original>
